<compile_context>
chip_gen: v6e
topology: v6e:2x2x1
jax: 0.10.0
libtpu: 0.0.40
codegen_flags: <defaults>
</compile_context>

<pallas_src>
import math
from dataclasses import dataclass

import jax
import jax.numpy as jnp
from jax.experimental import pallas as pl
from jax.experimental.pallas import tpu as pltpu


@dataclass
class LinearWeight:
    weight: jnp.ndarray = None
    bias: jnp.ndarray = None


@dataclass
class MetaPrefixEncoderWeight:
    down_projection: LinearWeight = None
    up_projection: LinearWeight = None


_LANE = 128


def _round_up(x, m):
    return ((x + m - 1) // m) * m


def _hw_budgets():
    """(per-buffer weight-tile bytes, vmem_limit_bytes) tuned per TPU generation."""
    weight_tile = 4 * 1024 * 1024       # v5e/v6e: measured >=85% of HBM roofline
    vmem_limit = 32 * 1024 * 1024
    try:
        info = pltpu.get_tpu_info()
        vmem_cap = getattr(info, "vmem_capacity_bytes", None)
    except Exception:
        vmem_cap = None
    if vmem_cap is not None and vmem_cap <= 64 * 1024 * 1024:
        # v7x-like chip: ~3.2 TB/s HBM per TC makes the fixed ~0.35us/step grid
        # overhead proportionally larger, so use bigger per-buffer tiles; two
        # 10 MiB double-buffered weight tiles + bias/out/e still fit comfortably
        # under the 64 MiB physical VMEM with headroom.
        weight_tile = 10 * 1024 * 1024
        vmem_limit = 44 * 1024 * 1024
    return weight_tile, vmem_limit


def _choose_tile_lanes(n_lanes, budget_lanes):
    """Pick the tile width (in 128-lane groups) along the fused output dim.

    Constraints: (a) divides n_lanes exactly so NO padded weight columns are
    streamed, (b) a single weight buffer fits the per-buffer VMEM budget,
    (c) leaves ~>=8 grid steps (DMA/compute overlap + megacore sharding) while
    never shrinking below 4 lane-groups (512 cols) just to manufacture steps.
    """
    if n_lanes >= 8:
        cap = min(budget_lanes, max(n_lanes // 8, 4))
    else:
        cap = min(budget_lanes, max(n_lanes // 2, 1))
    cap = max(1, min(cap, n_lanes))
    for d in range(cap, 0, -1):
        if n_lanes % d == 0:
            return d
    return 1


# ------------------------- Pallas kernels (hot path) -------------------------

def _hypernet_kernel(e_ref, wt_ref, b_ref, y_ref):
    # e_ref:  (L, E)  f32 layer-embedding rows (resident every grid step)
    # wt_ref: (E, TN) one lane-dense column tile of the fused generator weights
    # b_ref:  (1, TN) matching fused-bias tile
    # y_ref:  (L, TN) matching output tile
    w = wt_ref[...]
    if w.dtype == jnp.float32:
        lhs = e_ref[...]
    else:
        # Single-pass bf16 MXU; accumulation stays f32.
        lhs = e_ref[...].astype(jnp.bfloat16)
        w = w.astype(jnp.bfloat16)
    # TODO(synk): on v7x with a compressed (bf16/int8) stream and L==1 the MXU
    # push cadence for this thin matmul can exceed DMA time; a VPU broadcast
    # multiply-accumulate over the E terms would be cheaper there.
    acc = jnp.dot(lhs, w, preferred_element_type=jnp.float32)
    y_ref[...] = (acc + b_ref[...].astype(jnp.float32)).astype(y_ref.dtype)


def _hypernet_kernel_int8(e_ref, wt_ref, scale_ref, b_ref, y_ref):
    # int8 weight stream: per-output-column dequant is a single VPU multiply on
    # the f32 accumulator (the VPU slot has huge slack on this DMA-bound path).
    w = wt_ref[...].astype(jnp.float32).astype(jnp.bfloat16)   # int values exact in bf16
    lhs = e_ref[...].astype(jnp.bfloat16)
    acc = jnp.dot(lhs, w, preferred_element_type=jnp.float32)
    acc = acc * scale_ref[...]
    y_ref[...] = (acc + b_ref[...].astype(jnp.float32)).astype(y_ref.dtype)


def fused_hypernet_matvec(e_rows, wt, b_row, scale_row=None, *,
                          tile_n, out_dtype, vmem_limit_bytes):
    """y = dequant(e_rows @ wt) + b_row, tiled along the fused output dim."""
    L, E = e_rows.shape
    E2, tot_pad = wt.shape
    assert E == E2
    assert tile_n % _LANE == 0 and tot_pad % tile_n == 0

    w_item = jnp.dtype(wt.dtype).itemsize
    b_item = jnp.dtype(b_row.dtype).itemsize
    o_item = jnp.dtype(out_dtype).itemsize
    has_scale = scale_row is not None

    # VMEM sanity: every block is double-buffered by the BlockSpec pipeline.
    per_step = (E * tile_n * w_item
                + L * tile_n * o_item
                + tile_n * b_item
                + (tile_n * 4 if has_scale else 0)
                + L * E * 4)
    if 2 * per_step > vmem_limit_bytes:
        # TODO(synk): tile the E (reduction) axis with a VMEM accumulator for
        # very large embedding_dim instead of failing here.
        raise ValueError(
            f"hypernet tile does not fit VMEM: need {2 * per_step} bytes, "
            f"limit {vmem_limit_bytes}; reduce embedding_dim or add K-tiling")

    cost = pl.CostEstimate(
        flops=2 * L * E * tot_pad,
        transcendentals=0,
        bytes_accessed=(L * E * 4
                        + E * tot_pad * w_item
                        + tot_pad * b_item
                        + (tot_pad * 4 if has_scale else 0)
                        + L * tot_pad * o_item),
    )

    in_specs = [
        pl.BlockSpec((L, E), lambda j: (0, 0)),          # embeddings (resident)
        pl.BlockSpec((E, tile_n), lambda j: (0, j)),     # streamed weight tile
    ]
    args = [e_rows, wt]
    if has_scale:
        in_specs.append(pl.BlockSpec((1, tile_n), lambda j: (0, j)))
        args.append(scale_row)
        kernel = _hypernet_kernel_int8
    else:
        kernel = _hypernet_kernel
    in_specs.append(pl.BlockSpec((1, tile_n), lambda j: (0, j)))
    args.append(b_row)

    return pl.pallas_call(
        kernel,
        out_shape=jax.ShapeDtypeStruct((L, tot_pad), out_dtype),
        grid=(tot_pad // tile_n,),
        in_specs=in_specs,
        out_specs=pl.BlockSpec((L, tile_n), lambda j: (0, j)),
        compiler_params=pltpu.CompilerParams(
            dimension_semantics=("parallel",),           # megacore-shardable
            vmem_limit_bytes=vmem_limit_bytes,
        ),
        cost_estimate=cost,
    )(*args)


# ----------------------------- Module wrapper --------------------------------

class MetaPrefixEncoderHyperNetPallas:
    """JAX/Pallas re-implementation of MetaPrefixEncoderHyperNet forward."""

    def __init__(self, input_dim, hidden_dim, output_dim, embedding_dim, key,
                 weight_dtype=jnp.bfloat16, out_dtype=None):
        self.input_dim = input_dim
        self.hidden_dim = hidden_dim
        self.output_dim = output_dim
        self.embedding_dim = embedding_dim
        self.weight_dtype = jnp.dtype(weight_dtype)
        if out_dtype is None:
            out_dtype = (jnp.float32 if self.weight_dtype == jnp.dtype(jnp.float32)
                         else jnp.bfloat16)
        self.out_dtype = jnp.dtype(out_dtype)

        def linear_init(k, out_f, in_f):
            # nn.Linear default init: U(-1/sqrt(in_f), 1/sqrt(in_f))
            kw, kb = jax.random.split(k)
            bound = 1.0 / math.sqrt(in_f)
            w = jax.random.uniform(kw, (out_f, in_f), jnp.float32, -bound, bound)
            b = jax.random.uniform(kb, (out_f,), jnp.float32, -bound, bound)
            return w, b

        k1, k2, k3, k4 = jax.random.split(key, 4)
        E = embedding_dim
        # down_hypernet: BaseHyperNet(input_dim, hidden_dim, E)
        self.dw_w, self.dw_b = linear_init(k1, input_dim * hidden_dim, E)
        self.db_w, self.db_b = linear_init(k2, hidden_dim, E)
        # up_hypernet: BaseHyperNet(hidden_dim, output_dim, E)
        self.uw_w, self.uw_b = linear_init(k3, hidden_dim * output_dim, E)
        self.ub_w, self.ub_b = linear_init(k4, output_dim, E)

        # Fuse the four nn.Linear generators into one (TOT, E) matrix.
        n_dw = input_dim * hidden_dim
        n_db = hidden_dim
        n_uw = hidden_dim * output_dim
        n_ub = output_dim
        self.tot = n_dw + n_db + n_uw + n_ub
        self._splits = (n_dw, n_dw + n_db, n_dw + n_db + n_uw, self.tot)

        w_all = jnp.concatenate([self.dw_w, self.db_w, self.uw_w, self.ub_w], axis=0)
        b_all = jnp.concatenate([self.dw_b, self.db_b, self.uw_b, self.ub_b], axis=0)

        # Pad the fused output dim ONLY to the next lane multiple (128); the tile
        # width is chosen as an exact divisor so no padded bytes are streamed.
        self.tot_pad = _round_up(self.tot, _LANE)
        pad = self.tot_pad - self.tot
        w_all = jnp.pad(w_all, ((0, pad), (0, 0)))
        b_all = jnp.pad(b_all, ((0, pad),))

        weight_tile_bytes, self.vmem_limit_bytes = _hw_budgets()
        w_item = self.weight_dtype.itemsize
        n_lanes = self.tot_pad // _LANE
        budget_lanes = max(1, weight_tile_bytes // max(1, E * w_item * _LANE))
        self.tile_n = _choose_tile_lanes(n_lanes, budget_lanes) * _LANE

        if self.weight_dtype == jnp.dtype(jnp.int8):
            # Per-output-column symmetric quantization; f32 scale row streamed
            # alongside the bias and applied in the kernel epilogue.
            absmax = jnp.max(jnp.abs(w_all), axis=1)
            scale = jnp.maximum(absmax, 1e-12) / 127.0
            q = jnp.clip(jnp.round(w_all / scale[:, None]), -127, 127).astype(jnp.int8)
            self.wt_all = jnp.transpose(q)                          # (E, TOT_pad) int8
            self.scale_row = scale[None, :].astype(jnp.float32)     # (1, TOT_pad) f32
            self.b_all = b_all[None, :].astype(jnp.bfloat16)        # bias in bf16
        else:
            # Pre-transpose so the kernel does e(L,E) @ Wt(E,TOT_pad).
            self.wt_all = jnp.transpose(w_all).astype(self.weight_dtype)
            self.scale_row = None
            b_dt = (jnp.float32 if self.weight_dtype == jnp.dtype(jnp.float32)
                    else jnp.bfloat16)
            self.b_all = b_all[None, :].astype(b_dt)
        # TODO(synk): add an fp8 (e4m3) weight-stream option for v7x (its MXU has
        # no integer path); the per-column-scale epilogue above already covers it.

    # ---- unpack one row of the fused output into the PyTorch structures ----
    def _unpack(self, y_row):
        s0, s1, s2, s3 = self._splits
        down_w = y_row[:s0].reshape(self.hidden_dim, self.input_dim)
        down_b = y_row[s0:s1].reshape(-1)
        up_w = y_row[s1:s2].reshape(self.output_dim, self.hidden_dim)
        up_b = y_row[s2:s3].reshape(-1)
        return MetaPrefixEncoderWeight(
            down_projection=LinearWeight(weight=down_w, bias=down_b),
            up_projection=LinearWeight(weight=up_w, bias=up_b),
        )

    def _run(self, e_rows):
        # Embeddings stay f32 in the wrapper; only the weight stream is narrowed.
        return fused_hypernet_matvec(
            e_rows.astype(jnp.float32), self.wt_all, self.b_all, self.scale_row,
            tile_n=self.tile_n, out_dtype=self.out_dtype,
            vmem_limit_bytes=self.vmem_limit_bytes)

    def __call__(self, layer_embeddings):
        # layer_embeddings: (embedding_dim,) — matches the unbatched PyTorch API.
        e_rows = layer_embeddings.reshape(1, self.embedding_dim)
        y = self._run(e_rows)                                    # (1, TOT_pad)
        return self._unpack(y[0, :self.tot])

    def generate_batch(self, layer_embeddings_batch):
        # Preferred entry point: one pallas_call amortizes the dominant (E, TOT)
        # weight stream over L layer embeddings.
        L = layer_embeddings_batch.shape[0]
        e_rows = layer_embeddings_batch.reshape(L, self.embedding_dim)
        y = self._run(e_rows)                                    # (L, TOT_pad)
        return [self._unpack(y[l, :self.tot]) for l in range(L)]

    # Pure-JAX f32 reference for correctness checks.
    def reference(self, layer_embeddings):
        e = layer_embeddings.astype(jnp.float32)
        down_w = (self.dw_w @ e + self.dw_b).reshape(self.hidden_dim, self.input_dim)
        down_b = (self.db_w @ e + self.db_b).reshape(-1)
        up_w = (self.uw_w @ e + self.uw_b).reshape(self.output_dim, self.hidden_dim)
        up_b = (self.ub_w @ e + self.ub_b).reshape(-1)
        return MetaPrefixEncoderWeight(
            down_projection=LinearWeight(down_w, down_b),
            up_projection=LinearWeight(up_w, up_b),
        )


def _assert_close(out, ref, atol):
    pairs = [
        ("down.weight", out.down_projection.weight, ref.down_projection.weight),
        ("down.bias", out.down_projection.bias, ref.down_projection.bias),
        ("up.weight", out.up_projection.weight, ref.up_projection.weight),
        ("up.bias", out.up_projection.bias, ref.up_projection.bias),
    ]
    for name, a, b in pairs:
        a32 = a.astype(jnp.float32)
        err = float(jnp.max(jnp.abs(a32 - b)))
        assert jnp.allclose(a32, b, atol=atol), f"{name} mismatch, max abs err {err}"


if __name__ == "__main__":
    key = jax.random.PRNGKey(0)
    k_params, k_emb, k_batch = jax.random.split(key, 3)

    input_dim, hidden_dim, output_dim, embedding_dim = 64, 32, 64, 64
    layer_embeddings = jax.random.normal(k_emb, (embedding_dim,), jnp.float32)
    L = 4
    emb_batch = jax.random.normal(k_batch, (L, embedding_dim), jnp.float32)

    # --- f32 weight stream: matches the f32 reference -----------------------
    net_f32 = MetaPrefixEncoderHyperNetPallas(
        input_dim=input_dim, hidden_dim=hidden_dim, output_dim=output_dim,
        embedding_dim=embedding_dim, key=k_params, weight_dtype=jnp.float32)

    out = net_f32(layer_embeddings)
    jax.block_until_ready(out.down_projection.weight)
    jax.block_until_ready(out.up_projection.bias)
    assert out.down_projection.weight.shape == (hidden_dim, input_dim)
    assert out.down_projection.bias.shape == (hidden_dim,)
    assert out.up_projection.weight.shape == (output_dim, hidden_dim)
    assert out.up_projection.bias.shape == (output_dim,)
    _assert_close(out, net_f32.reference(layer_embeddings), atol=1e-5)

    outs = net_f32.generate_batch(emb_batch)
    jax.block_until_ready(outs[-1].up_projection.bias)
    for l in range(L):
        _assert_close(outs[l], net_f32.reference(emb_batch[l]), atol=1e-5)

    # --- bf16 weight + bias + output stream (default), batched --------------
    net_bf16 = MetaPrefixEncoderHyperNetPallas(
        input_dim=input_dim, hidden_dim=hidden_dim, output_dim=output_dim,
        embedding_dim=embedding_dim, key=k_params, weight_dtype=jnp.bfloat16)
    outs_b = net_bf16.generate_batch(emb_batch)
    jax.block_until_ready(outs_b[-1].up_projection.bias)
    for l in range(L):
        _assert_close(outs_b[l], net_bf16.reference(emb_batch[l]), atol=7e-2)

    # --- int8 weight stream (per-column f32 scales, dequant in epilogue) ----
    net_i8 = MetaPrefixEncoderHyperNetPallas(
        input_dim=input_dim, hidden_dim=hidden_dim, output_dim=output_dim,
        embedding_dim=embedding_dim, key=k_params, weight_dtype=jnp.int8)
    out_i = net_i8(layer_embeddings)
    jax.block_until_ready(out_i.up_projection.bias)
    _assert_close(out_i, net_i8.reference(layer_embeddings), atol=7e-2)

    print("KERNEL_OK")
</pallas_src>

<mosaic_0001>
module attributes {stable_mosaic.version = 11 : i64} {
  func.func @_hypernet_kernel(%arg0: i32, %arg1: memref<1x64xf32, #tpu.memory_space<vmem>>, %arg2: memref<64x384xf32, #tpu.memory_space<vmem>>, %arg3: memref<1x384xf32, #tpu.memory_space<vmem>>, %arg4: memref<1x384xf32, #tpu.memory_space<vmem>>) attributes {dimension_semantics = [#tpu.dimension_semantics<parallel>], iteration_bounds = array<i64: 11>, scalar_prefetch = 0 : i64, scratch_operands = 0 : i64, tpu.core_type = #tpu.core_type<tc>, window_params = [{pipeline_mode = #tpu.pipeline_mode<synchronous>, transform_indices = @transform_0, window_bounds = array<i64: 1, 64>}, {transform_indices = @transform_1, window_bounds = array<i64: 64, 384>}, {transform_indices = @transform_2, window_bounds = array<i64: 1, 384>}, {transform_indices = @transform_3, window_bounds = array<i64: 1, 384>}]} {
    %c0 = arith.constant 0 : index
    %c0_0 = arith.constant 0 : index
    %0 = vector.load %arg2[%c0, %c0_0] : memref<64x384xf32, #tpu.memory_space<vmem>>, vector<64x384xf32>
    %c0_1 = arith.constant 0 : index
    %c0_2 = arith.constant 0 : index
    %1 = vector.load %arg1[%c0_1, %c0_2] : memref<1x64xf32, #tpu.memory_space<vmem>>, vector<1x64xf32>
    %cst = arith.constant dense<0.000000e+00> : vector<1x384xf32>
    %2 = tpu.matmul %1, %0, %cst {dimension_numbers = #tpu.dot_dimension_numbers<[1], [0], [0], [1], [0, 0, 1, 1], [], []>} : vector<1x64xf32>, vector<64x384xf32>, vector<1x384xf32> -> vector<1x384xf32>
    %c0_3 = arith.constant 0 : index
    %c0_4 = arith.constant 0 : index
    %3 = vector.load %arg3[%c0_3, %c0_4] : memref<1x384xf32, #tpu.memory_space<vmem>>, vector<1x384xf32>
    %4 = arith.addf %2, %3 : vector<1x384xf32>
    %c0_5 = arith.constant 0 : index
    %c0_6 = arith.constant 0 : index
    %5 = vector.load %arg4[%c0_5, %c0_6] : memref<1x384xf32, #tpu.memory_space<vmem>>, vector<1x384xf32>
    tpu.vector_store %arg4[%c0_5, %c0_6], %4 {strides = array<i32>} : memref<1x384xf32, #tpu.memory_space<vmem>>, vector<1x384xf32>,
    return
  }
  func.func @transform_0(%arg0: i32) -> (i32, i32) {
    %c0_i32 = arith.constant 0 : i32
    %c0_i32_0 = arith.constant 0 : i32
    %c0_i32_1 = arith.constant 0 : i32
    return %c0_i32, %c0_i32_0 : i32, i32
  }
  func.func @transform_1(%arg0: i32) -> (i32, i32) {
    %c0_i32 = arith.constant 0 : i32
    %c0_i32_0 = arith.constant 0 : i32
    return %c0_i32, %arg0 : i32, i32
  }
  func.func @transform_2(%arg0: i32) -> (i32, i32) {
    %c0_i32 = arith.constant 0 : i32
    %c0_i32_0 = arith.constant 0 : i32
    return %c0_i32, %arg0 : i32, i32
  }
  func.func @transform_3(%arg0: i32) -> (i32, i32) {
    %c0_i32 = arith.constant 0 : i32
    %c0_i32_0 = arith.constant 0 : i32
    return %c0_i32, %arg0 : i32, i32
  }
}

</mosaic_0001>

<llo_original>
// kernel: tpu_custom_call.1
$region0: #{tpu_custom_call.1}
  #allocation0 [shape = 'u32[]', space=smem, size = 0x4, offset = 0x4, fixed_abs, tag = 'smem constant byte address 0x4 - core index']
  #allocation1 [shape = 'u32[144,128]{1,0:T(1,128)}', space=vmem, size = 0x12000, scoped, tag = 'internal scratch']
  %s0 = inlined_call_operand.hbm [shape: f32[1,64], index: 0, kind: input, shape index: {}]
  %s1 = inlined_call_operand.hbm [shape: f32[64,4224], index: 1, kind: input, shape index: {}]
  %s2 = inlined_call_operand.hbm [shape: f32[1,4224], index: 2, kind: input, shape index: {}]
  %s3 = inlined_call_operand.hbm [shape: f32[1,4224], index: 3, kind: output, shape index: {}]
  %s4 = sld [smem:[#allocation0]]
  $region57: #{tpu_custom_call.1} parent=0
    _
  %s6 = ssub.s32 1, %s4
  %s7 = scalar_select 0, %s6, %s4
  $region1: #{tpu_custom_call.1} parent=0
    #allocation2 [shape = 'u8[512]{0}', space=vmem, size = 0x400, scoped, tag = 'input window, operand 0, single buffered']
    #allocation3 [shape = 's32[2]{0}', space=sflag, size = 0x8, scoped, tag = 'scoped memory for tpu_custom_call.1']
    #allocation4 [shape = 's32[2]{0}', space=sflag, size = 0x8, scoped, tag = 'scoped memory for tpu_custom_call.1']
    #allocation5 [shape = 'u8[196608]{0}', space=vmem, size = 0x30000, scoped, tag = 'input window, operand 1']
    #allocation6 [shape = 's32[2]{0}', space=sflag, size = 0x8, scoped, tag = 'scoped memory for tpu_custom_call.1']
    #allocation7 [shape = 'u8[3072]{0}', space=vmem, size = 0xc00, scoped, tag = 'input window, operand 2']
    #allocation8 [shape = 'u8[3072]{0}', space=vmem, size = 0xc00, scoped, tag = 'output window, operand 0']
    %8 = vsyncpa [#allocation3], 0
    %9 = vsyncpa [#allocation6], 0
    %s10 = scalar_lea.sflag [#allocation6], 1
    %11 = vsyncpa %s10, 0
    %12 = vsyncpa [#allocation4], 0
    %s13 = scalar_lea.sflag [#allocation4], 1
    %14 = vsyncpa %s13, 0
    loop: start=0, step=1, limit=13
    $region2: #{tpu_custom_call.1} parent=1 // loop_pre_header
      _
    $region3: #{tpu_custom_call.1} parent=1 // loop_header
      %s16 = sphi 0, %s20
      %p17 = scmp.ge.s32.totalorder %s16, 13
      %s24 = sphi 0, %s24
      %s26 = sphi 0, %s24
      %s27 = sphi 0, %s26
      %s41 = sphi 0, %s27
      %s47 = sphi 0, %s49
      %s50 = sphi 0, %s47
      %s51 = sphi 0, %s50
      %s67 = sphi 0, %s51
      %s73 = sphi 0, %s75
      %s76 = sphi 0, %s73
      %s77 = sphi 0, %s76
      %s93 = sphi 0, %s77
      %s99 = sphi 0, %s101
      %s102 = sphi 0, %s99
      %s103 = sphi 0, %s102
      %s119 = sphi 0, %s103
    $region4: #{tpu_custom_call.1} parent=1 // loop_header_branch
      %19 = sbr.rel (%p17) target = $region8
    $region5: #{tpu_custom_call.1} parent=1 // loop_body
      %s21 = ssub.s32 %s16, 1
      %s22 = ssub.s32 %s16, 2
      %s23 = sadd.s32 %s16, 1
      %s25 = sadd.s32 %s24, 1
      %p28 = scmp.eq.s32.totalorder %s16, 10
      %p29 = scmp.ne.s32.totalorder %s24, %s26
      %p30 = scmp.eq.s32.totalorder %s16, 0
      %p31 = por %p29, %p30
      %p32 = scmp.ne.s32.totalorder %s24, %s26
      %p33 = scmp.eq.s32.totalorder %s21, 10
      %p34 = por %p32, %p33
      %p35 = scmp.ne.s32.totalorder %s26, %s27
      %p36 = scmp.eq.s32.totalorder %s21, 0
      %p37 = por %p35, %p36
      %p38 = scmp.ne.s32.totalorder %s26, %s27
      %p39 = scmp.eq.s32.totalorder %s22, 10
      %p40 = por %p38, %p39
      %p42 = scmp.ne.s32.totalorder %s27, %s41
      %p43 = scmp.eq.s32.totalorder %s22, 0
      %p44 = por %p42, %p43
      %s45 = ssub.s32 %s16, %s23
      %p46 = scmp.eq.s32.totalorder %s45, 0
      %s48 = sadd.s32 %s47, 1
      %s49 = scalar_select %p46, %s47, %s48
      %p52 = pneg %p46
      %p53 = scmp.eq.s32.totalorder %s16, 10
      %p54 = por %p52, %p53
      %p55 = scmp.ne.s32.totalorder %s47, %s50
      %p56 = scmp.eq.s32.totalorder %s16, 0
      %p57 = por %p55, %p56
      %p58 = scmp.ne.s32.totalorder %s47, %s50
      %p59 = scmp.eq.s32.totalorder %s21, 10
      %p60 = por %p58, %p59
      %p61 = scmp.ne.s32.totalorder %s50, %s51
      %p62 = scmp.eq.s32.totalorder %s21, 0
      %p63 = por %p61, %p62
      %p64 = scmp.ne.s32.totalorder %s50, %s51
      %p65 = scmp.eq.s32.totalorder %s22, 10
      %p66 = por %p64, %p65
      %p68 = scmp.ne.s32.totalorder %s51, %s67
      %p69 = scmp.eq.s32.totalorder %s22, 0
      %p70 = por %p68, %p69
      %s71 = ssub.s32 %s16, %s23
      %p72 = scmp.eq.s32.totalorder %s71, 0
      %s74 = sadd.s32 %s73, 1
      %s75 = scalar_select %p72, %s73, %s74
      %p78 = pneg %p72
      %p79 = scmp.eq.s32.totalorder %s16, 10
      %p80 = por %p78, %p79
      %p81 = scmp.ne.s32.totalorder %s73, %s76
      %p82 = scmp.eq.s32.totalorder %s16, 0
      %p83 = por %p81, %p82
      %p84 = scmp.ne.s32.totalorder %s73, %s76
      %p85 = scmp.eq.s32.totalorder %s21, 10
      %p86 = por %p84, %p85
      %p87 = scmp.ne.s32.totalorder %s76, %s77
      %p88 = scmp.eq.s32.totalorder %s21, 0
      %p89 = por %p87, %p88
      %p90 = scmp.ne.s32.totalorder %s76, %s77
      %p91 = scmp.eq.s32.totalorder %s22, 10
      %p92 = por %p90, %p91
      %p94 = scmp.ne.s32.totalorder %s77, %s93
      %p95 = scmp.eq.s32.totalorder %s22, 0
      %p96 = por %p94, %p95
      %s97 = ssub.s32 %s16, %s23
      %p98 = scmp.eq.s32.totalorder %s97, 0
      %s100 = sadd.s32 %s99, 1
      %s101 = scalar_select %p98, %s99, %s100
      %p104 = pneg %p98
      %p105 = scmp.eq.s32.totalorder %s16, 10
      %p106 = por %p104, %p105
      %p107 = scmp.ne.s32.totalorder %s99, %s102
      %p108 = scmp.eq.s32.totalorder %s16, 0
      %p109 = por %p107, %p108
      %p110 = scmp.ne.s32.totalorder %s99, %s102
      %p111 = scmp.eq.s32.totalorder %s21, 10
      %p112 = por %p110, %p111
      %p113 = scmp.ne.s32.totalorder %s102, %s103
      %p114 = scmp.eq.s32.totalorder %s21, 0
      %p115 = por %p113, %p114
      %p116 = scmp.ne.s32.totalorder %s102, %s103
      %p117 = scmp.eq.s32.totalorder %s22, 10
      %p118 = por %p116, %p117
      %p120 = scmp.ne.s32.totalorder %s103, %s119
      %p121 = scmp.eq.s32.totalorder %s22, 0
      %p122 = por %p120, %p121
      %p123 = scmp.le.s32.totalorder 1, %s16
      %p124 = scmp.lt.s32.totalorder %s16, 12
      %p125 = pnand %p123, %p124
      %p126 = pneg %p125
      // Predicated region
      $region9: #{tpu_custom_call.1} parent=5 // pred_check
        _
      $region10: #{tpu_custom_call.1} parent=5 // pred_check_branch
        %128 = sbr.rel (%p125) target = $region12
      $region11: #{tpu_custom_call.1} parent=5 // pred_region
        %s129 = ssub.s32 %s16, 1
        // Predicated region
        $region13: #{tpu_custom_call.1} parent=11 // pred_check
          %p130 = pneg %p37
        $region14: #{tpu_custom_call.1} parent=11 // pred_check_branch
          %132 = sbr.rel (%p130) target = $region16
        $region15: #{tpu_custom_call.1} parent=11 // pred_region
          %s134 = ssub.s32 16, 16
          %135 = vsyncadd [#allocation3], %s134
          %s137 = sshll.u32 [#allocation2], 4
          %s138 = int_to_ptr.vmem [resolvable:$true] %s137
          %140 = dma.hbm_to_vmem [thread:$0]  %s0, 16, %s138, [#allocation3]
        $region16: #{tpu_custom_call.1} parent=11 // pred_fallthru
          _
      $region12: #{tpu_custom_call.1} parent=5 // pred_fallthru
        _
      %p141 = scmp.lt.s32.totalorder %s16, 11
      // Predicated region
      $region17: #{tpu_custom_call.1} parent=5 // pred_check
        %p142 = pneg %p141
      $region18: #{tpu_custom_call.1} parent=5 // pred_check_branch
        %144 = sbr.rel (%p142) target = $region20
      $region19: #{tpu_custom_call.1} parent=5 // pred_region
        // Predicated region
        $region21: #{tpu_custom_call.1} parent=19 // pred_check
          %p145 = pneg %p57
        $region22: #{tpu_custom_call.1} parent=19 // pred_check_branch
          %147 = sbr.rel (%p145) target = $region24
        $region23: #{tpu_custom_call.1} parent=19 // pred_region
          %s148 = sand.u32 %s16, 1
          %s149 = scalar_lea.sflag [#allocation6], %s148
          %s150 = sand.u32 %s47, 1
          %s151 = smul.addr %s150, 192
          %s152 = scalar_lea.vmem [#allocation5], %s151
          %s153 = smul.u32 3, %s16
          %s155 = ssub.s32 3072, 3072
          %156 = vsyncadd %s149, %s155
          %s157 = smul.addr %s153, 128
          %s158 = scalar_lea.hbm %s1, %s157
          %s159 = sshll.u32 %s152, 4
          %s160 = int_to_ptr.vmem [resolvable:$true] %s159
          %165 = dma.hbm_to_vmem [thread:$0]  %s158, 3072, %s160, %s149, 4224, 384, 24
        $region24: #{tpu_custom_call.1} parent=19 // pred_fallthru
          _
        // Predicated region
        $region25: #{tpu_custom_call.1} parent=19 // pred_check
          %p166 = pneg %p83
        $region26: #{tpu_custom_call.1} parent=19 // pred_check_branch
          %168 = sbr.rel (%p166) target = $region28
        $region27: #{tpu_custom_call.1} parent=19 // pred_region
          %s169 = sand.u32 %s16, 1
          %s170 = scalar_lea.sflag [#allocation6], %s169
          %s171 = sand.u32 %s73, 1
          %s172 = smul.addr %s171, 3
          %s173 = scalar_lea.vmem [#allocation7], %s172
          %s174 = smul.u32 3, %s16
          %s176 = ssub.s32 48, 48
          %177 = vsyncadd %s170, %s176
          %s178 = smul.addr %s174, 16
          %s179 = scalar_lea.hbm %s2, %s178
          %s181 = sshll.u32 %s173, 4
          %s182 = int_to_ptr.vmem [resolvable:$true] %s181
          %184 = dma.hbm_to_vmem [thread:$0]  %s179, 48, %s182, %s170
        $region28: #{tpu_custom_call.1} parent=19 // pred_fallthru
          _
      $region20: #{tpu_custom_call.1} parent=5 // pred_fallthru
        _
      %p185 = scmp.le.s32.totalorder 1, %s16
      %p186 = scmp.lt.s32.totalorder %s16, 12
      %p187 = pnand %p185, %p186
      %p188 = pneg %p187
      // Predicated region
      $region29: #{tpu_custom_call.1} parent=5 // pred_check
        _
      $region30: #{tpu_custom_call.1} parent=5 // pred_check_branch
        %190 = sbr.rel (%p187) target = $region32
      $region31: #{tpu_custom_call.1} parent=5 // pred_region
        %s191 = ssub.s32 %s16, 1
        // Predicated region
        $region33: #{tpu_custom_call.1} parent=31 // pred_check
          %p192 = pneg %p37
        $region34: #{tpu_custom_call.1} parent=31 // pred_check_branch
          %194 = sbr.rel (%p192) target = $region36
        $region35: #{tpu_custom_call.1} parent=31 // pred_region
          %195 = dma.done [#allocation3], 16
        $region36: #{tpu_custom_call.1} parent=31 // pred_fallthru
          _
        %s196 = sand.u32 %s21, 1
        %s197 = scalar_lea.sflag [#allocation6], %s196
        %s198 = sand.u32 %s50, 1
        %s199 = smul.addr %s198, 192
        %s200 = scalar_lea.vmem [#allocation5], %s199
        // Predicated region
        $region37: #{tpu_custom_call.1} parent=31 // pred_check
          %p201 = pneg %p63
        $region38: #{tpu_custom_call.1} parent=31 // pred_check_branch
          %203 = sbr.rel (%p201) target = $region40
        $region39: #{tpu_custom_call.1} parent=31 // pred_region
          %204 = dma.done %s197, 3072
        $region40: #{tpu_custom_call.1} parent=31 // pred_fallthru
          _
        %s205 = sand.u32 %s21, 1
        %s206 = scalar_lea.sflag [#allocation6], %s205
        %s207 = sand.u32 %s76, 1
        %s208 = smul.addr %s207, 3
        %s209 = scalar_lea.vmem [#allocation7], %s208
        // Predicated region
        $region41: #{tpu_custom_call.1} parent=31 // pred_check
          %p210 = pneg %p89
        $region42: #{tpu_custom_call.1} parent=31 // pred_check_branch
          %212 = sbr.rel (%p210) target = $region44
        $region43: #{tpu_custom_call.1} parent=31 // pred_region
          %213 = dma.done %s206, 48
        $region44: #{tpu_custom_call.1} parent=31 // pred_fallthru
          _
        %p214 = pneg %p37
        %p215 = pneg %p34
        %s216 = sand.u32 %s21, 1
        %s217 = scalar_lea.sflag [#allocation6], %s216
        %s218 = sand.u32 %s50, 1
        %s219 = smul.addr %s218, 192
        %s220 = scalar_lea.vmem [#allocation5], %s219
        %p221 = pneg %p63
        %p222 = pneg %p60
        %s223 = sand.u32 %s21, 1
        %s224 = scalar_lea.sflag [#allocation6], %s223
        %s225 = sand.u32 %s76, 1
        %s226 = smul.addr %s225, 3
        %s227 = scalar_lea.vmem [#allocation7], %s226
        %p228 = pneg %p89
        %p229 = pneg %p86
        %p230 = pneg %p115
        %p231 = pneg %p112
        %s232 = sand.u32 %s102, 1
        %s233 = scalar_lea.sflag [#allocation4], %s232
        %s234 = sand.u32 %s102, 1
        %s235 = smul.addr %s234, 3
        %s236 = scalar_lea.vmem [#allocation8], %s235
        %s237 = smul.u32 3, %s21
        %s238 = smul.u32 3, %s21
        %s239 = smul.u32 3, %s21
        %v240 = vld [vmem:[%s200] sm:$0xff]
        %v241 = vld [vmem:[%s200 + $0x8] sm:$0xff]
        %v242 = vld [vmem:[%s200 + $0x10] sm:$0xff]
        %v243 = vld [vmem:[%s200 + $0x18] sm:$0xff]
        %v244 = vld [vmem:[%s200 + $0x20] sm:$0xff]
        %v245 = vld [vmem:[%s200 + $0x28] sm:$0xff]
        %v246 = vld [vmem:[%s200 + $0x30] sm:$0xff]
        %v247 = vld [vmem:[%s200 + $0x38] sm:$0xff]
        %v248 = vld [vmem:[%s200 + $0x40] sm:$0xff]
        %v249 = vld [vmem:[%s200 + $0x48] sm:$0xff]
        %v250 = vld [vmem:[%s200 + $0x50] sm:$0xff]
        %v251 = vld [vmem:[%s200 + $0x58] sm:$0xff]
        %v252 = vld [vmem:[%s200 + $0x60] sm:$0xff]
        %v253 = vld [vmem:[%s200 + $0x68] sm:$0xff]
        %v254 = vld [vmem:[%s200 + $0x70] sm:$0xff]
        %v255 = vld [vmem:[%s200 + $0x78] sm:$0xff]
        %v256 = vld [vmem:[%s200 + $0x80] sm:$0xff]
        %v257 = vld [vmem:[%s200 + $0x88] sm:$0xff]
        %v258 = vld [vmem:[%s200 + $0x90] sm:$0xff]
        %v259 = vld [vmem:[%s200 + $0x98] sm:$0xff]
        %v260 = vld [vmem:[%s200 + $0xa0] sm:$0xff]
        %v261 = vld [vmem:[%s200 + $0xa8] sm:$0xff]
        %v262 = vld [vmem:[%s200 + $0xb0] sm:$0xff]
        %v263 = vld [vmem:[%s200 + $0xb8] sm:$0xff]
        %v264 = vld [vmem:[#allocation2] sm:$0x1]
        %v265 = vld [vmem:[%s209] sm:$0x7]
        %v267 = vlaneseq
        %v268 = vshrl.u32 %v267, 7
        %v269 = vsub.s32 0, %v268
        %v270 = vrot.slane %v265, %v269
        %v271 = vlaneseq
        %v272 = vshrl.u32 %v271, 7
        %v273 = vsub.s32 1, %v272
        %v274 = vrot.slane %v265, %v273
        %v275 = vlaneseq
        %v276 = vshrl.u32 %v275, 7
        %v277 = vsub.s32 2, %v276
        %v278 = vrot.slane %v265, %v277
        %vm282 = vcmask 523264
        %v284 = vsel %vm282, %v264, 0
        %286 = vmatprep.subr.mxu0 0.0
        %287 = vmatpush1.msra.mxu0 0.0
        %288 = vmatprep.subr.mxu0 0.0
        %289 = vmatpush1.msra.mxu0 0.0
        %290 = vmatprep.subr.mxu0 0.0
        %291 = vmatpush1.msra.mxu0 0.0
        %292 = vmatprep.subr.mxu0 0.0
        %293 = vmatpush1.msra.mxu0 0.0
        %294 = vmatprep.subr.mxu0 0.0
        %295 = vmatpush1.msra.mxu0 0.0
        %296 = vmatprep.subr.mxu0 0.0
        %297 = vmatpush1.msra.mxu0 0.0
        %298 = vmatprep.subr.mxu0 0.0
        %299 = vmatpush1.msra.mxu0 0.0
        %300 = vmatprep.subr.mxu0 0.0
        %301 = vmatpush1.msra.mxu0 0.0
        %302 = vmatprep.subr.mxu0 %v262
        %303 = vmatpush1.msra.mxu0 %v261
        %304 = vmatprep.subr.mxu0 %v259
        %305 = vmatpush1.msra.mxu0 %v258
        %306 = vmatprep.subr.mxu0 %v256
        %307 = vmatpush1.msra.mxu0 %v255
        %308 = vmatprep.subr.mxu0 %v253
        %309 = vmatpush1.msra.mxu0 %v252
        %310 = vmatprep.subr.mxu0 %v250
        %311 = vmatpush1.msra.mxu0 %v249
        %312 = vmatprep.subr.mxu0 %v247
        %313 = vmatpush1.msra.mxu0 %v246
        %314 = vmatprep.subr.mxu0 %v244
        %315 = vmatpush1.msra.mxu0 %v243
        %316 = vmatprep.subr.mxu0 %v241
        %317 = vmatpush1.msra.mxu0 %v240
        %318 = vmatprep.subr.mxu0 0.0
        %319 = vmatpush2.msra.mxu0 0.0
        %320 = vmatprep.subr.mxu0 0.0
        %321 = vmatpush2.msra.mxu0 0.0
        %322 = vmatprep.subr.mxu0 0.0
        %323 = vmatpush2.msra.mxu0 0.0
        %324 = vmatprep.subr.mxu0 0.0
        %325 = vmatpush2.msra.mxu0 0.0
        %326 = vmatprep.subr.mxu0 0.0
        %327 = vmatpush2.msra.mxu0 0.0
        %328 = vmatprep.subr.mxu0 0.0
        %329 = vmatpush2.msra.mxu0 0.0
        %330 = vmatprep.subr.mxu0 0.0
        %331 = vmatpush2.msra.mxu0 0.0
        %332 = vmatprep.subr.mxu0 0.0
        %333 = vmatpush2.msra.mxu0 0.0
        %334 = vmatprep.subr.mxu0 0.0
        %335 = vmatpush2.msra.mxu0 0.0
        %336 = vmatprep.subr.mxu0 0.0
        %337 = vmatpush2.msra.mxu0 0.0
        %338 = vmatprep.subr.mxu0 0.0
        %339 = vmatpush2.msra.mxu0 0.0
        %340 = vmatprep.subr.mxu0 0.0
        %341 = vmatpush2.msra.mxu0 0.0
        %342 = vmatprep.subr.mxu0 0.0
        %343 = vmatpush2.msra.mxu0 0.0
        %344 = vmatprep.subr.mxu0 0.0
        %345 = vmatpush2.msra.mxu0 0.0
        %346 = vmatprep.subr.mxu0 0.0
        %347 = vmatpush2.msra.mxu0 0.0
        %348 = vmatprep.subr.mxu0 0.0
        %349 = vmatpush2.msra.mxu0 0.0
        %350 = vmatprep.mubr.f32.mxu0 0.0
        %351 = vmatmul.mubr.f32.gmra.mxu0 %v284
        %v352 = vpop.f32.mrf.mxu0
        %v353 = vadd.f32 %v270, %v352
        %v354 = vpop.f32.mrf.mxu0
        %v355 = vadd.f32 %v274, %v354
        %356 = vdwg.mxu0
        %357 = vmatprep.subr.mxu0 0.0
        %358 = vmatpush1.msra.mxu0 0.0
        %359 = vmatprep.subr.mxu0 0.0
        %360 = vmatpush1.msra.mxu0 0.0
        %361 = vmatprep.subr.mxu0 0.0
        %362 = vmatpush1.msra.mxu0 0.0
        %363 = vmatprep.subr.mxu0 0.0
        %364 = vmatpush1.msra.mxu0 0.0
        %365 = vmatprep.subr.mxu0 0.0
        %366 = vmatpush1.msra.mxu0 0.0
        %367 = vmatprep.subr.mxu0 0.0
        %368 = vmatpush1.msra.mxu0 0.0
        %369 = vmatprep.subr.mxu0 0.0
        %370 = vmatpush1.msra.mxu0 0.0
        %371 = vmatprep.subr.mxu0 0.0
        %372 = vmatpush1.msra.mxu0 0.0
        %373 = vmatprep.subr.mxu0 0.0
        %374 = vmatpush1.msra.mxu0 %v263
        %375 = vmatprep.subr.mxu0 0.0
        %376 = vmatpush1.msra.mxu0 %v260
        %377 = vmatprep.subr.mxu0 0.0
        %378 = vmatpush1.msra.mxu0 %v257
        %379 = vmatprep.subr.mxu0 0.0
        %380 = vmatpush1.msra.mxu0 %v254
        %381 = vmatprep.subr.mxu0 0.0
        %382 = vmatpush1.msra.mxu0 %v251
        %383 = vmatprep.subr.mxu0 0.0
        %384 = vmatpush1.msra.mxu0 %v248
        %385 = vmatprep.subr.mxu0 0.0
        %386 = vmatpush1.msra.mxu0 %v245
        %387 = vmatprep.subr.mxu0 0.0
        %388 = vmatpush1.msra.mxu0 %v242
        %389 = vmatprep.subr.mxu0 0.0
        %390 = vmatpush2.msra.mxu0 0.0
        %391 = vmatprep.subr.mxu0 0.0
        %392 = vmatpush2.msra.mxu0 0.0
        %393 = vmatprep.subr.mxu0 0.0
        %394 = vmatpush2.msra.mxu0 0.0
        %395 = vmatprep.subr.mxu0 0.0
        %396 = vmatpush2.msra.mxu0 0.0
        %397 = vmatprep.subr.mxu0 0.0
        %398 = vmatpush2.msra.mxu0 0.0
        %399 = vmatprep.subr.mxu0 0.0
        %400 = vmatpush2.msra.mxu0 0.0
        %401 = vmatprep.subr.mxu0 0.0
        %402 = vmatpush2.msra.mxu0 0.0
        %403 = vmatprep.subr.mxu0 0.0
        %404 = vmatpush2.msra.mxu0 0.0
        %405 = vmatprep.subr.mxu0 0.0
        %406 = vmatpush2.msra.mxu0 0.0
        %407 = vmatprep.subr.mxu0 0.0
        %408 = vmatpush2.msra.mxu0 0.0
        %409 = vmatprep.subr.mxu0 0.0
        %410 = vmatpush2.msra.mxu0 0.0
        %411 = vmatprep.subr.mxu0 0.0
        %412 = vmatpush2.msra.mxu0 0.0
        %413 = vmatprep.subr.mxu0 0.0
        %414 = vmatpush2.msra.mxu0 0.0
        %415 = vmatprep.subr.mxu0 0.0
        %416 = vmatpush2.msra.mxu0 0.0
        %417 = vmatprep.subr.mxu0 0.0
        %418 = vmatpush2.msra.mxu0 0.0
        %419 = vmatprep.subr.mxu0 0.0
        %420 = vmatpush2.msra.mxu0 0.0
        %421 = vmatprep.mubr.f32.mxu0 0.0
        %422 = vmatmul.mubr.f32.gmra.mxu0 %v284
        %v423 = vpop.f32.mrf.mxu0
        %v424 = vadd.f32 %v278, %v423
        %v425 = vpop.f32.mrf.mxu0
        %426 = vdwg.mxu0
        %v430 = vcombine.low %v353, %v355
        %v432 = vunpack.c.l.s4 1966171168
        %v433 = vunpack.c.0.s8 %v432
        %v434 = vlaneseq
        %v435 = vshrl.u32 %v434, 7
        %v436 = vsub.s32 %v433, %v435
        %v437 = vrot.slane %v430, %v436
        %v439 = vunpack.c.l.s4 1966171168
        %v440 = vunpack.c.0.s8 %v439
        %v441 = vlaneseq
        %v442 = vshrl.u32 %v441, 7
        %v443 = vsub.s32 %v440, %v442
        %v444 = vrot.slane %v424, %v443
        %v445 = vcombine.low %v437, %v444
        %v447 = vunpack.c.l.s4 1966171168
        %v448 = vunpack.c.0.s8 %v447
        %v449 = vlaneseq
        %v450 = vshrl.u32 %v449, 7
        %v451 = vsub.s32 %v448, %v450
        %v452 = vrot.slane %v445, %v451
        %v454 = vlaneseq
        %vm455 = vcmp.ge.s32.totalorder %v454, 0
        %vm456 = vcmp.lt.s32.totalorder %v454, 384
        %vm457 = vmand %vm455, %vm456
        %458 = vst.msk [vmem:[%s236] sm:$0x7] %vm457, %v452
        %s459 = sand.u32 %s102, 1
        %s460 = scalar_lea.sflag [#allocation4], %s459
        %s461 = sand.u32 %s102, 1
        %s462 = smul.addr %s461, 3
        %s463 = scalar_lea.vmem [#allocation8], %s462
        // Predicated region
        $region45: #{tpu_custom_call.1} parent=31 // pred_check
          %p464 = pneg %p112
        $region46: #{tpu_custom_call.1} parent=31 // pred_check_branch
          %466 = sbr.rel (%p464) target = $region48
        $region47: #{tpu_custom_call.1} parent=31 // pred_region
          %s467 = smul.u32 3, %s21
          %s469 = ssub.s32 48, 48
          %470 = vsyncadd %s460, %s469
          %s471 = smul.addr %s467, 16
          %s472 = scalar_lea.hbm %s3, %s471
          %s474 = sshll.u32 %s463, 4
          %s475 = int_to_ptr.vmem [resolvable:$true] %s474
          %477 = dma.vmem_to_hbm [thread:$0]  %s475, 48, %s472, %s460
        $region48: #{tpu_custom_call.1} parent=31 // pred_fallthru
          _
      $region32: #{tpu_custom_call.1} parent=5 // pred_fallthru
        _
      %p478 = scmp.le.s32.totalorder 2, %s16
      // Predicated region
      $region49: #{tpu_custom_call.1} parent=5 // pred_check
        %p479 = pneg %p478
      $region50: #{tpu_custom_call.1} parent=5 // pred_check_branch
        %481 = sbr.rel (%p479) target = $region52
      $region51: #{tpu_custom_call.1} parent=5 // pred_region
        %s482 = ssub.s32 %s16, 2
        // Predicated region
        $region53: #{tpu_custom_call.1} parent=51 // pred_check
          %p483 = pneg %p118
        $region54: #{tpu_custom_call.1} parent=51 // pred_check_branch
          %485 = sbr.rel (%p483) target = $region56
        $region55: #{tpu_custom_call.1} parent=51 // pred_region
          %s486 = sand.u32 %s103, 1
          %s487 = scalar_lea.sflag [#allocation4], %s486
          %s488 = sand.u32 %s103, 1
          %s489 = smul.addr %s488, 3
          %s490 = scalar_lea.vmem [#allocation8], %s489
          %491 = dma.done %s487, 48
        $region56: #{tpu_custom_call.1} parent=51 // pred_fallthru
          _
      $region52: #{tpu_custom_call.1} parent=5 // pred_fallthru
        _
    $region6: #{tpu_custom_call.1} parent=1 // loop_footer
      %s20 = sadd.s32 1, %s16
    $region7: #{tpu_custom_call.1} parent=1 // loop_footer_branch
      %15 = sbr.rel target = $region3
    $region8: #{tpu_custom_call.1} parent=1 // loop_exit
      _
    %492 = vsyncpa [#allocation3], 1
    %s493 = scalar_lea.sflag [#allocation3], 1
    %494 = vsyncpa %s493, 1
    %495 = vsyncpa [#allocation6], 1
    %s496 = scalar_lea.sflag [#allocation6], 1
    %497 = vsyncpa %s496, 1
    %498 = vsyncpa [#allocation4], 1
    %s499 = scalar_lea.sflag [#allocation4], 1
    %500 = vsyncpa %s499, 1

</llo_original>
